<compile_context>
chip_gen: v6e
topology: v6e:2x2x1
jax: 0.10.0
libtpu: 0.0.40
codegen_flags: <defaults>
</compile_context>

<pallas_src>
from functools import partial

import jax
import jax.numpy as jnp
from jax.experimental import pallas as pl
from jax.experimental.pallas import tpu as pltpu


def _apply_kernel(pred_ref, x_ref, o_ref):
    # pred_ref: (1,) int32 in SMEM (scalar prefetch). 1 -> "+3" branch, 0 -> "*8".
    x = x_ref[...]
    pred = pred_ref[0] > 0
    scale = jnp.where(pred, 1.0, 8.0).astype(x.dtype)
    bias = jnp.where(pred, 3.0, 0.0).astype(x.dtype)
    o_ref[...] = x * scale + bias


def _round_up(a: int, b: int) -> int:
    return -(-a // b) * b


@partial(jax.jit, static_argnames=("tile_rows",))
def conditional_branching(x: jax.Array, *, tile_rows: int = 8192) -> jax.Array:
    """Pallas implementation of ConditionalBranching.forward (any ND input)."""
    orig_shape = x.shape
    dtype = x.dtype
    n = x.size
    lanes = 128

    # ---- Phase 1: global reduction -> scalar predicate (XLA handles/fuses it).
    # Note: float accumulation order can differ from PyTorch when sum ~ 0.
    pred = jnp.sum(x) > 0
    pred_i32 = pred.astype(jnp.int32).reshape(1)

    flat = x.reshape(-1)
    rem = n % lanes            # ragged tail (< 128 elements)
    n_bulk = n - rem
    rows = n_bulk // lanes

    pieces = []

    # ---- Phase 2: tiled elementwise apply on the lane-dense (rows, 128) bulk.
    if rows > 0:
        itemsize = jnp.dtype(dtype).itemsize
        # Packed sublane granularity: 8 rows f32, 16 bf16/f16, 32 int8/fp8.
        sub = max(8, 32 // itemsize)
        # Large tiles (multi-MiB) amortize the ~0.35us per-step overhead, but
        # keep >= 2 grid steps so v7x's second TensorCore gets work.
        tr = min(_round_up(tile_rows, sub), _round_up(pl.cdiv(rows, 2), sub))
        num_tiles = pl.cdiv(rows, tr)      # partial edge block handled by Pallas

        x2d = flat[:n_bulk].reshape(rows, lanes)

        cost = pl.CostEstimate(
            flops=2 * n_bulk,                            # one mul + one add per elem
            transcendentals=0,
            bytes_accessed=2 * rows * lanes * itemsize,  # actual slab in + out
        )

        out2d = pl.pallas_call(
            _apply_kernel,
            out_shape=jax.ShapeDtypeStruct((rows, lanes), dtype),
            grid_spec=pltpu.PrefetchScalarGridSpec(
                num_scalar_prefetch=1,
                grid=(num_tiles,),
                in_specs=[pl.BlockSpec((tr, lanes), lambda i, p: (i, 0))],
                out_specs=pl.BlockSpec((tr, lanes), lambda i, p: (i, 0)),
            ),
            compiler_params=pltpu.CompilerParams(
                dimension_semantics=("parallel",),   # shard tiles across TCs on v7x
                vmem_limit_bytes=32 * 1024 * 1024,   # in+out double-buffered <= 16 MiB
            ),
            cost_estimate=cost,
        )(pred_i32, x2d)

        pieces.append(out2d.reshape(-1))

    # ---- Ragged tail (< 128 elements): trivial jnp select, same branch math.
    if rem:
        tail = flat[n_bulk:]
        tail_out = jnp.where(pred,
                             tail + jnp.asarray(3, dtype),
                             tail * jnp.asarray(8, dtype))
        pieces.append(tail_out)

    out = pieces[0] if len(pieces) == 1 else jnp.concatenate(pieces)
    return out.reshape(orig_shape)


if __name__ == "__main__":
    key = jax.random.PRNGKey(0)
    # Small NCHW input consistent with a conv-style module: (B=2, C=4, H=16, W=16)
    x = jax.random.normal(key, (2, 4, 16, 16), dtype=jnp.float32)

    out = jax.block_until_ready(conditional_branching(x))
    ref = jnp.where(jnp.sum(x) > 0, x + 3.0, x * 8.0)
    assert out.shape == x.shape and out.dtype == x.dtype
    assert jnp.allclose(out, ref, atol=1e-6), "mismatch vs reference"

    # Deterministically exercise the "+3" branch (all-positive input).
    x_pos = jnp.abs(x) + 1.0
    out_pos = jax.block_until_ready(conditional_branching(x_pos))
    assert jnp.allclose(out_pos, x_pos + 3.0, atol=1e-6)

    # Deterministically exercise the "*8" branch (all-negative input).
    x_neg = -(jnp.abs(x) + 1.0)
    out_neg = jax.block_until_ready(conditional_branching(x_neg))
    assert jnp.allclose(out_neg, x_neg * 8.0, atol=1e-6)

    # Ragged shape: bulk (8 rows x 128) + 61-element tail, no padding copies.
    x_rag = jax.random.normal(jax.random.PRNGKey(1), (5, 7, 31), dtype=jnp.float32)
    out_rag = jax.block_until_ready(conditional_branching(x_rag))
    ref_rag = jnp.where(jnp.sum(x_rag) > 0, x_rag + 3.0, x_rag * 8.0)
    assert jnp.allclose(out_rag, ref_rag, atol=1e-6)

    # Tiny shape (< 128 elements): pure tail path, no Pallas call needed.
    x_tiny = jax.random.normal(jax.random.PRNGKey(2), (3, 5, 7), dtype=jnp.float32)
    out_tiny = jax.block_until_ready(conditional_branching(x_tiny))
    ref_tiny = jnp.where(jnp.sum(x_tiny) > 0, x_tiny + 3.0, x_tiny * 8.0)
    assert jnp.allclose(out_tiny, ref_tiny, atol=1e-6)

    print("KERNEL_OK")
</pallas_src>

<mosaic_0001>
module attributes {stable_mosaic.version = 11 : i64} {
  func.func @_apply_kernel(%arg0: i32, %arg1: memref<1xi32, #tpu.memory_space<smem>>, %arg2: memref<8x128xf32, #tpu.memory_space<vmem>>, %arg3: memref<8x128xf32, #tpu.memory_space<vmem>>) attributes {dimension_semantics = [#tpu.dimension_semantics<parallel>], iteration_bounds = array<i64: 2>, scalar_prefetch = 1 : i64, scratch_operands = 0 : i64, tpu.core_type = #tpu.core_type<tc>, window_params = [{transform_indices = @transform_0, window_bounds = array<i64: 8, 128>}, {transform_indices = @transform_1, window_bounds = array<i64: 8, 128>}]} {
    %c0 = arith.constant 0 : index
    %c0_0 = arith.constant 0 : index
    %0 = vector.load %arg2[%c0, %c0_0] : memref<8x128xf32, #tpu.memory_space<vmem>>, vector<8x128xf32>
    %c0_1 = arith.constant 0 : index
    %1 = memref.load %arg1[%c0_1] : memref<1xi32, #tpu.memory_space<smem>>
    %c0_i32 = arith.constant 0 : i32
    %2 = arith.cmpi sgt, %1, %c0_i32 : i32
    %cst = arith.constant 1.000000e+00 : f32
    %cst_2 = arith.constant 8.000000e+00 : f32
    %3 = arith.select %2, %cst, %cst_2 : f32
    %cst_3 = arith.constant 3.000000e+00 : f32
    %cst_4 = arith.constant 0.000000e+00 : f32
    %4 = arith.select %2, %cst_3, %cst_4 : f32
    %5 = vector.broadcast %3 : f32 to vector<8x128xf32>
    %6 = arith.mulf %0, %5 : vector<8x128xf32>
    %7 = vector.broadcast %4 : f32 to vector<8x128xf32>
    %8 = arith.addf %6, %7 : vector<8x128xf32>
    %c0_5 = arith.constant 0 : index
    %c0_6 = arith.constant 0 : index
    %9 = vector.load %arg3[%c0_5, %c0_6] : memref<8x128xf32, #tpu.memory_space<vmem>>, vector<8x128xf32>
    tpu.vector_store %arg3[%c0_5, %c0_6], %8 {strides = array<i32>} : memref<8x128xf32, #tpu.memory_space<vmem>>, vector<8x128xf32>,
    return
  }
  func.func @transform_0(%arg0: i32, %arg1: memref<1xi32, #tpu.memory_space<smem>>) -> (i32, i32) {
    %c0_i32 = arith.constant 0 : i32
    %c0_i32_0 = arith.constant 0 : i32
    return %arg0, %c0_i32 : i32, i32
  }
  func.func @transform_1(%arg0: i32, %arg1: memref<1xi32, #tpu.memory_space<smem>>) -> (i32, i32) {
    %c0_i32 = arith.constant 0 : i32
    %c0_i32_0 = arith.constant 0 : i32
    return %arg0, %c0_i32 : i32, i32
  }
}

</mosaic_0001>

<llo_original>
// kernel: conditional_branching.1
$region0: #{conditional_branching.1}
  #allocation0 [shape = 'u32[]', space=smem, size = 0x4, offset = 0x4, fixed_abs, tag = 'smem constant byte address 0x4 - core index']
  #allocation1 [shape = 'u32[144,128]{1,0:T(1,128)}', space=vmem, size = 0x12000, scoped, tag = 'internal scratch']
  #allocation2 [shape = 's32[1]{0}', space=sflag, size = 0x4, scoped, tag = 'scoped memory for conditional_branching.1']
  #allocation3 [shape = 's32[1]{0:T(128)S(6)}', space=smem, size = 0x200, scoped, tag = 'prefetched SMEM operand 0']
  %s0 = inlined_call_operand.<no memory space> [shape: s32[1], index: 0, kind: input, shape index: {}]
  %s1 = inlined_call_operand.vmem [shape: f32[16,128], index: 1, kind: input, shape index: {}]
  %s2 = inlined_call_operand.vmem [shape: f32[16,128], index: 2, kind: output, shape index: {}]
  %s3 = sld [smem:[#allocation0]]
  $region37: #{conditional_branching.1} parent=0
    _
  %s5 = ssub.s32 1, %s3
  %s6 = scalar_select 0, %s5, %s3
  %7 = sst [smem:[#allocation3]] %s0
  loop: start=0, step=1, limit=4
  $region2: #{conditional_branching.1} parent=0 // loop_pre_header
    _
  $region3: #{conditional_branching.1} parent=0 // loop_header
    %s9 = sphi 0, %s13
    %p10 = scmp.ge.s32.totalorder %s9, 4
    %s19 = sphi 0, %s21
    %s22 = sphi 0, %s19
    %s23 = sphi 0, %s22
    %s39 = sphi 0, %s23
    %s45 = sphi 0, %s47
    %s48 = sphi 0, %s45
    %s49 = sphi 0, %s48
    %s65 = sphi 0, %s49
  $region4: #{conditional_branching.1} parent=0 // loop_header_branch
    %12 = sbr.rel (%p10) target = $region8
  $region5: #{conditional_branching.1} parent=0 // loop_body
    %s14 = ssub.s32 %s9, 1
    %s15 = ssub.s32 %s9, 2
    %s16 = sadd.s32 %s9, 1
    %s17 = ssub.s32 %s9, %s16
    %p18 = scmp.eq.s32.totalorder %s17, 0
    %s20 = sadd.s32 %s19, 1
    %s21 = scalar_select %p18, %s19, %s20
    %p24 = pneg %p18
    %p25 = scmp.eq.s32.totalorder %s9, 1
    %p26 = por %p24, %p25
    %p27 = scmp.ne.s32.totalorder %s19, %s22
    %p28 = scmp.eq.s32.totalorder %s9, 0
    %p29 = por %p27, %p28
    %p30 = scmp.ne.s32.totalorder %s19, %s22
    %p31 = scmp.eq.s32.totalorder %s14, 1
    %p32 = por %p30, %p31
    %p33 = scmp.ne.s32.totalorder %s22, %s23
    %p34 = scmp.eq.s32.totalorder %s14, 0
    %p35 = por %p33, %p34
    %p36 = scmp.ne.s32.totalorder %s22, %s23
    %p37 = scmp.eq.s32.totalorder %s15, 1
    %p38 = por %p36, %p37
    %p40 = scmp.ne.s32.totalorder %s23, %s39
    %p41 = scmp.eq.s32.totalorder %s15, 0
    %p42 = por %p40, %p41
    %s43 = ssub.s32 %s9, %s16
    %p44 = scmp.eq.s32.totalorder %s43, 0
    %s46 = sadd.s32 %s45, 1
    %s47 = scalar_select %p44, %s45, %s46
    %p50 = pneg %p44
    %p51 = scmp.eq.s32.totalorder %s9, 1
    %p52 = por %p50, %p51
    %p53 = scmp.ne.s32.totalorder %s45, %s48
    %p54 = scmp.eq.s32.totalorder %s9, 0
    %p55 = por %p53, %p54
    %p56 = scmp.ne.s32.totalorder %s45, %s48
    %p57 = scmp.eq.s32.totalorder %s14, 1
    %p58 = por %p56, %p57
    %p59 = scmp.ne.s32.totalorder %s48, %s49
    %p60 = scmp.eq.s32.totalorder %s14, 0
    %p61 = por %p59, %p60
    %p62 = scmp.ne.s32.totalorder %s48, %s49
    %p63 = scmp.eq.s32.totalorder %s15, 1
    %p64 = por %p62, %p63
    %p66 = scmp.ne.s32.totalorder %s49, %s65
    %p67 = scmp.eq.s32.totalorder %s15, 0
    %p68 = por %p66, %p67
    %p69 = scmp.le.s32.totalorder 1, %s9
    %p70 = scmp.lt.s32.totalorder %s9, 3
    %p71 = pnand %p69, %p70
    %p72 = pneg %p71
    // Predicated region
    $region9: #{conditional_branching.1} parent=5 // pred_check
      _
    $region10: #{conditional_branching.1} parent=5 // pred_check_branch
      %74 = sbr.rel (%p71) target = $region12
    $region11: #{conditional_branching.1} parent=5 // pred_region
      %s75 = ssub.s32 %s9, 1
    $region12: #{conditional_branching.1} parent=5 // pred_fallthru
      _
    %p76 = scmp.lt.s32.totalorder %s9, 2
    // Predicated region
    $region13: #{conditional_branching.1} parent=5 // pred_check
      %p77 = pneg %p76
    $region14: #{conditional_branching.1} parent=5 // pred_check_branch
      %79 = sbr.rel (%p77) target = $region16
    $region15: #{conditional_branching.1} parent=5 // pred_region
      // Predicated region
      $region17: #{conditional_branching.1} parent=15 // pred_check
        %p80 = pneg %p29
      $region18: #{conditional_branching.1} parent=15 // pred_check_branch
        %82 = sbr.rel (%p80) target = $region20
      $region19: #{conditional_branching.1} parent=15 // pred_region
        %p83 = scmp.lt.s32.totalorder %s9, 1
        %s84 = scalar_select %p83, %s9, 1
        %s85 = smul.addr %s84, 8
        %s86 = scalar_lea.vmem %s1, %s85
      $region20: #{conditional_branching.1} parent=15 // pred_fallthru
        _
    $region16: #{conditional_branching.1} parent=5 // pred_fallthru
      _
    %p87 = scmp.le.s32.totalorder 1, %s9
    %p88 = scmp.lt.s32.totalorder %s9, 3
    %p89 = pnand %p87, %p88
    %p90 = pneg %p89
    // Predicated region
    $region21: #{conditional_branching.1} parent=5 // pred_check
      _
    $region22: #{conditional_branching.1} parent=5 // pred_check_branch
      %92 = sbr.rel (%p89) target = $region24
    $region23: #{conditional_branching.1} parent=5 // pred_region
      %s93 = ssub.s32 %s9, 1
      %p94 = scmp.lt.s32.totalorder %s14, 1
      %s95 = scalar_select %p94, %s14, 1
      %s96 = smul.addr %s95, 8
      %s97 = scalar_lea.vmem %s1, %s96
      %p98 = pneg %p35
      %p99 = pneg %p32
      %p100 = pneg %p61
      %p101 = pneg %p58
      %p102 = scmp.lt.s32.totalorder %s14, 1
      %s103 = scalar_select %p102, %s14, 1
      %s104 = smul.addr %s103, 8
      %s105 = scalar_lea.vmem %s2, %s104
      %p106 = scmp.lt.s32.totalorder %s14, 1
      %s107 = scalar_select %p106, %s14, 1
      %s108 = smul.addr %s107, 8
      %s109 = scalar_lea.vmem %s1, %s108
      %p110 = scmp.lt.s32.totalorder %s14, 1
      %s111 = scalar_select %p110, %s14, 1
      %s112 = smul.addr %s111, 8
      %s113 = scalar_lea.vmem %s2, %s112
      %v114 = vld [vmem:[%s109] sm:$0xff]
      %s115 = sld [smem:[#allocation3]]
      %p116 = scmp.gt.s32.totalorder %s115, 0
      %s117 = scalar_select %p116, 1.0, 8.0
      %s118 = scalar_select %p116, 3.0, 0.0
      %v119 = vstv %s117
      %v120 = vmul.f32 %v114, %v119
      %v121 = vstv %s118
      %v122 = vadd.f32 %v120, %v121
      %123 = vst [vmem:[%s113] sm:$0xff] %v122
      %p124 = scmp.lt.s32.totalorder %s14, 1
      %s125 = scalar_select %p124, %s14, 1
      %s126 = smul.addr %s125, 8
      %s127 = scalar_lea.vmem %s2, %s126
      // Predicated region
      $region25: #{conditional_branching.1} parent=23 // pred_check
        %p128 = pneg %p58
      $region26: #{conditional_branching.1} parent=23 // pred_check_branch
        %130 = sbr.rel (%p128) target = $region28
      $region27: #{conditional_branching.1} parent=23 // pred_region
        _
      $region28: #{conditional_branching.1} parent=23 // pred_fallthru
        _
    $region24: #{conditional_branching.1} parent=5 // pred_fallthru
      _
    %p131 = scmp.le.s32.totalorder 2, %s9
    // Predicated region
    $region29: #{conditional_branching.1} parent=5 // pred_check
      %p132 = pneg %p131
    $region30: #{conditional_branching.1} parent=5 // pred_check_branch
      %134 = sbr.rel (%p132) target = $region32
    $region31: #{conditional_branching.1} parent=5 // pred_region
      %s135 = ssub.s32 %s9, 2
      // Predicated region
      $region33: #{conditional_branching.1} parent=31 // pred_check
        %p136 = pneg %p64
      $region34: #{conditional_branching.1} parent=31 // pred_check_branch
        %138 = sbr.rel (%p136) target = $region36
      $region35: #{conditional_branching.1} parent=31 // pred_region
        %p139 = scmp.lt.s32.totalorder %s15, 1
        %s140 = scalar_select %p139, %s15, 1
        %s141 = smul.addr %s140, 8
        %s142 = scalar_lea.vmem %s2, %s141
      $region36: #{conditional_branching.1} parent=31 // pred_fallthru
        _
    $region32: #{conditional_branching.1} parent=5 // pred_fallthru
      _
  $region6: #{conditional_branching.1} parent=0 // loop_footer
    %s13 = sadd.s32 1, %s9
  $region7: #{conditional_branching.1} parent=0 // loop_footer_branch
    %8 = sbr.rel target = $region3
  $region8: #{conditional_branching.1} parent=0 // loop_exit
    _

</llo_original>
